<compile_context>
chip_gen: v6e
topology: v6e:2x2x1
jax: 0.10.0
libtpu: 0.0.40
codegen_flags: <defaults>
</compile_context>

<pallas_src>
import functools

import jax
import jax.numpy as jnp
from jax.experimental import pallas as pl
from jax.experimental.pallas import tpu as pltpu


_LANE = 128
_LN_EPS = 1e-5


def _round_up(x, m):
    return (x + m - 1) // m * m


# ----------------------------------------------------------------------------
# Kernel
# ----------------------------------------------------------------------------
def _critic_kernel(f1_true, f2_true, use_ln, cast_bf16,
                   s_ref, a_ref,
                   w1s_ref, w1a_ref, b1_ref, ln1w_ref, ln1b_ref,
                   w2_ref, b2_ref, ln2w_ref, ln2b_ref,
                   wq_ref, bq_ref,
                   out_ref):
    def mxu(x, w_ref):
        if cast_bf16:
            x = x.astype(jnp.bfloat16)
        return jnp.dot(x, w_ref[...], preferred_element_type=jnp.float32)

    def layer_norm(h, f_true, w_ref, b_ref):
        # Two-pass variance (numerically safe); statistics over the TRUE
        # feature width, padded lanes masked out of the variance sum.
        f_pad = h.shape[-1]
        inv_f = 1.0 / float(f_true)
        mu = jnp.sum(h, axis=-1, keepdims=True) * inv_f
        d = h - mu
        if f_pad != f_true:
            lane = jax.lax.broadcasted_iota(jnp.int32, h.shape, dimension=1)
            d = jnp.where(lane < f_true, d, 0.0)
        var = jnp.sum(d * d, axis=-1, keepdims=True) * inv_f
        return d * jax.lax.rsqrt(var + _LN_EPS) * w_ref[...] + b_ref[...]

    # fc1(cat([state, action], 1)) == state @ W1s + action @ W1a + b1
    h = mxu(s_ref[...], w1s_ref)
    if a_ref.shape[1] == 1:
        # n_actions == 1: the K=1 contraction is an outer product -> VPU.
        h = h + a_ref[...] * w1a_ref[...].astype(jnp.float32)
    else:
        h = h + mxu(a_ref[...], w1a_ref)
    h = jnp.maximum(h + b1_ref[...], 0.0)                 # F.relu
    if use_ln:                                            # nn.LayerNorm(fc1_dims)
        h = layer_norm(h, f1_true, ln1w_ref, ln1b_ref)

    # fc2
    h = jnp.maximum(mxu(h, w2_ref) + b2_ref[...], 0.0)    # F.relu
    if use_ln:                                            # nn.LayerNorm(fc2_dims)
        h = layer_norm(h, f2_true, ln2w_ref, ln2b_ref)

    # q1: N=1 projection on the VPU (mul) + XLU lane reduce; scalar bias from
    # SMEM; store as a plain (bt, 1) column (no sublane->lane relayout).
    q = jnp.sum(h * wq_ref[...], axis=-1, keepdims=True)  # (bt, 1)
    out_ref[...] = q + bq_ref[0, 0]


# ----------------------------------------------------------------------------
# Wrapper
# ----------------------------------------------------------------------------
def critic_forward(state, action, kp, *, use_ln=False, num_blocks=None):
    """Pallas implementation of CriticNetwork.forward(state, action) -> (B, 1)."""
    B, S = state.shape
    _, A = action.shape
    f1_true, f2_true = kp["f1"], kp["f2"]
    f1_pad = kp["w1s"].shape[1]
    f2_pad = kp["w2"].shape[1]
    cast_bf16 = kp["w2"].dtype == jnp.bfloat16

    if num_blocks is None:
        # Single grid step by default (1-TC v5e/v6e: extra steps are pure
        # ~0.35 us per-step overhead).  Only for big batches tile at 512 rows
        # so the live (bt, f1_pad) fp32 intermediate stays near the vreg file
        # and the state/action DMA pipelines behind compute.
        num_blocks = B // 512 if (B > 512 and B % 512 == 0) else 1
    assert B % num_blocks == 0, "batch must divide evenly into grid blocks"
    bt = B // num_blocks
    assert num_blocks == 1 or bt % 8 == 0, "multi-block tiles need 8-row multiples"

    resident = lambda shape: pl.BlockSpec(shape, lambda i: (0, 0))  # weights stay put
    in_specs = [
        pl.BlockSpec((bt, S), lambda i: (i, 0)),    # state  (batch-tiled)
        pl.BlockSpec((bt, A), lambda i: (i, 0)),    # action (batch-tiled)
        resident((S, f1_pad)),                      # w1s  (state half of fc1)
        resident((A, f1_pad)),                      # w1a  (action half of fc1)
        resident((1, f1_pad)),                      # b1
        resident((1, f1_pad)),                      # ln1 weight
        resident((1, f1_pad)),                      # ln1 bias
        resident((f1_pad, f2_pad)),                 # w2
        resident((1, f2_pad)),                      # b2
        resident((1, f2_pad)),                      # ln2 weight
        resident((1, f2_pad)),                      # ln2 bias
        resident((1, f2_pad)),                      # wq as a row (VPU reduce)
        pl.BlockSpec(memory_space=pltpu.MemorySpace.SMEM),  # bq scalar in SMEM
    ]
    out_spec = pl.BlockSpec((bt, 1), lambda i: (i, 0))

    return pl.pallas_call(
        functools.partial(_critic_kernel, f1_true, f2_true, use_ln, cast_bf16),
        out_shape=jax.ShapeDtypeStruct((B, 1), jnp.float32),
        grid_spec=pltpu.PrefetchScalarGridSpec(
            num_scalar_prefetch=0,
            grid=(num_blocks,),
            in_specs=in_specs,
            out_specs=out_spec,
        ),
        compiler_params=pltpu.CompilerParams(
            dimension_semantics=("parallel",)),
    )(
        state.astype(jnp.float32), action.astype(jnp.float32),
        kp["w1s"], kp["w1a"], kp["b1"], kp["ln1_w"], kp["ln1_b"],
        kp["w2"], kp["b2"], kp["ln2_w"], kp["ln2_b"],
        kp["wq"], kp["bq"],
    )


# ----------------------------------------------------------------------------
# Parameters
# ----------------------------------------------------------------------------
def init_params(key, input_dim, n_actions, fc1_dims, fc2_dims):
    """Raw (torch-layout) params; nn.Linear default init U(-1/sqrt(fan_in), +)."""
    keys = jax.random.split(key, 6)

    def linear(kw, kb, fan_in, fan_out):
        bound = 1.0 / jnp.sqrt(float(fan_in))
        w = jax.random.uniform(kw, (fan_in, fan_out), jnp.float32, -bound, bound)
        b = jax.random.uniform(kb, (1, fan_out), jnp.float32, -bound, bound)
        return w, b

    w1, b1 = linear(keys[0], keys[1], input_dim + n_actions, fc1_dims)
    w2, b2 = linear(keys[2], keys[3], fc1_dims, fc2_dims)
    wq, bq = linear(keys[4], keys[5], fc2_dims, 1)
    return {
        "w1": w1, "b1": b1,                               # (S+A, F1), (1, F1)
        "ln1_w": jnp.ones((1, fc1_dims), jnp.float32),    # LayerNorm default init
        "ln1_b": jnp.zeros((1, fc1_dims), jnp.float32),
        "w2": w2, "b2": b2,                               # (F1, F2), (1, F2)
        "ln2_w": jnp.ones((1, fc2_dims), jnp.float32),
        "ln2_b": jnp.zeros((1, fc2_dims), jnp.float32),
        "wq": wq, "bq": bq,                               # (F2, 1), (1, 1)
    }


def prepare_params(p, input_dim, n_actions, *, use_bf16=False):
    """One-time kernel packing: split fc1 into state/action halves, zero-pad
    feature dims to lane multiples, optionally store matmul weights in bf16."""
    f1 = p["w1"].shape[1]
    f2 = p["w2"].shape[1]
    f1_pad = _round_up(f1, _LANE)
    f2_pad = _round_up(f2, _LANE)
    wdt = jnp.bfloat16 if use_bf16 else jnp.float32

    pad_c = lambda x, w: jnp.pad(x, ((0, 0), (0, w - x.shape[1])))
    pad_r = lambda x, h: jnp.pad(x, ((0, h - x.shape[0]), (0, 0)))

    w1 = pad_c(p["w1"], f1_pad)
    return {
        "f1": f1, "f2": f2,
        "w1s": w1[:input_dim].astype(wdt),                 # (S, F1p)
        "w1a": w1[input_dim:].astype(wdt),                 # (A, F1p)
        "b1": pad_c(p["b1"], f1_pad),
        "ln1_w": pad_c(p["ln1_w"], f1_pad),
        "ln1_b": pad_c(p["ln1_b"], f1_pad),
        "w2": pad_c(pad_r(p["w2"], f1_pad), f2_pad).astype(wdt),
        "b2": pad_c(p["b2"], f2_pad),
        "ln2_w": pad_c(p["ln2_w"], f2_pad),
        "ln2_b": pad_c(p["ln2_b"], f2_pad),
        "wq": pad_r(p["wq"], f2_pad).reshape(1, f2_pad),   # row, fp32 (VPU path)
        "bq": p["bq"],                                     # (1, 1) scalar -> SMEM
    }


# Pure-JAX reference (mirrors the PyTorch forward exactly).
def critic_ref(state, action, p, use_ln=False):
    hp = jax.lax.Precision.HIGHEST
    x = jnp.concatenate([state, action], axis=1)
    h = jnp.maximum(jnp.dot(x, p["w1"], precision=hp) + p["b1"], 0.0)
    if use_ln:
        mu = h.mean(-1, keepdims=True)
        var = ((h - mu) ** 2).mean(-1, keepdims=True)
        h = (h - mu) / jnp.sqrt(var + _LN_EPS) * p["ln1_w"] + p["ln1_b"]
    h = jnp.maximum(jnp.dot(h, p["w2"], precision=hp) + p["b2"], 0.0)
    if use_ln:
        mu = h.mean(-1, keepdims=True)
        var = ((h - mu) ** 2).mean(-1, keepdims=True)
        h = (h - mu) / jnp.sqrt(var + _LN_EPS) * p["ln2_w"] + p["ln2_b"]
    return jnp.dot(h, p["wq"], precision=hp) + p["bq"]


if __name__ == "__main__":
    INPUT_DIM, N_ACTIONS = 3, 1          # Pendulum-v1: obs dim 3, action dim 1
    key = jax.random.PRNGKey(0)
    k_data, k_params = jax.random.split(key)

    # (fc1, fc2, batch, use_ln, use_bf16, tol)
    cases = [
        (32, 32, 16, False, False, 1e-4),    # single block, no LN
        (32, 32, 16, True, False, 1e-4),     # single block, LN (masked pad lanes)
        (32, 32, 256, True, False, 1e-4),    # still a single block (no pointless split)
        (32, 32, 1024, True, False, 1e-4),   # 2 x 512-row batch tiles
        (400, 300, 64, True, True, 5e-2),    # realistic TD3 dims: pad->512/384, bf16 MXU
    ]

    ok = True
    for idx, (fc1, fc2, batch, use_ln, use_bf16, tol) in enumerate(cases):
        raw = init_params(jax.random.fold_in(k_params, idx),
                          INPUT_DIM, N_ACTIONS, fc1, fc2)
        kparams = prepare_params(raw, INPUT_DIM, N_ACTIONS, use_bf16=use_bf16)

        ks, ka = jax.random.split(jax.random.fold_in(k_data, idx))
        state = jax.random.normal(ks, (batch, INPUT_DIM), jnp.float32)
        action = jax.random.normal(ka, (batch, N_ACTIONS), jnp.float32)

        q = jax.block_until_ready(
            critic_forward(state, action, kparams, use_ln=use_ln))
        q_ref = critic_ref(state, action, raw, use_ln=use_ln)

        ok &= (q.shape == (batch, 1))
        ok &= bool(jnp.allclose(q, q_ref, atol=tol, rtol=tol))

    print("KERNEL_OK" if ok else "KERNEL_MISMATCH")
</pallas_src>

<mosaic_0001>
module attributes {stable_mosaic.version = 11 : i64} {
  func.func @_critic_kernel(%arg0: i32, %arg1: memref<16x3xf32, #tpu.memory_space<vmem>>, %arg2: memref<16x1xf32, #tpu.memory_space<vmem>>, %arg3: memref<3x128xf32, #tpu.memory_space<vmem>>, %arg4: memref<1x128xf32, #tpu.memory_space<vmem>>, %arg5: memref<1x128xf32, #tpu.memory_space<vmem>>, %arg6: memref<1x128xf32, #tpu.memory_space<vmem>>, %arg7: memref<1x128xf32, #tpu.memory_space<vmem>>, %arg8: memref<128x128xf32, #tpu.memory_space<vmem>>, %arg9: memref<1x128xf32, #tpu.memory_space<vmem>>, %arg10: memref<1x128xf32, #tpu.memory_space<vmem>>, %arg11: memref<1x128xf32, #tpu.memory_space<vmem>>, %arg12: memref<1x128xf32, #tpu.memory_space<vmem>>, %arg13: memref<1x1xf32, #tpu.memory_space<smem>>, %arg14: memref<16x1xf32, #tpu.memory_space<vmem>>) attributes {dimension_semantics = [#tpu.dimension_semantics<parallel>], iteration_bounds = array<i64: 1>, scalar_prefetch = 0 : i64, scratch_operands = 0 : i64, tpu.core_type = #tpu.core_type<tc>, window_params = [{transform_indices = @transform_0, window_bounds = array<i64: 16, 3>}, {transform_indices = @transform_1, window_bounds = array<i64: 16, 1>}, {pipeline_mode = #tpu.pipeline_mode<synchronous>, transform_indices = @transform_2, window_bounds = array<i64: 3, 128>}, {pipeline_mode = #tpu.pipeline_mode<synchronous>, transform_indices = @transform_3, window_bounds = array<i64: 1, 128>}, {pipeline_mode = #tpu.pipeline_mode<synchronous>, transform_indices = @transform_4, window_bounds = array<i64: 1, 128>}, {pipeline_mode = #tpu.pipeline_mode<synchronous>, transform_indices = @transform_5, window_bounds = array<i64: 1, 128>}, {pipeline_mode = #tpu.pipeline_mode<synchronous>, transform_indices = @transform_6, window_bounds = array<i64: 1, 128>}, {pipeline_mode = #tpu.pipeline_mode<synchronous>, transform_indices = @transform_7, window_bounds = array<i64: 128, 128>}, {pipeline_mode = #tpu.pipeline_mode<synchronous>, transform_indices = @transform_8, window_bounds = array<i64: 1, 128>}, {pipeline_mode = #tpu.pipeline_mode<synchronous>, transform_indices = @transform_9, window_bounds = array<i64: 1, 128>}, {pipeline_mode = #tpu.pipeline_mode<synchronous>, transform_indices = @transform_10, window_bounds = array<i64: 1, 128>}, {pipeline_mode = #tpu.pipeline_mode<synchronous>, transform_indices = @transform_11, window_bounds = array<i64: 1, 128>}, {transform_indices = @transform_12, window_bounds = array<i64: 1, 1>}, {transform_indices = @transform_13, window_bounds = array<i64: 16, 1>}]} {
    %c0 = arith.constant 0 : index
    %c0_0 = arith.constant 0 : index
    %0 = vector.load %arg1[%c0, %c0_0] : memref<16x3xf32, #tpu.memory_space<vmem>>, vector<16x3xf32>
    %c0_1 = arith.constant 0 : index
    %c0_2 = arith.constant 0 : index
    %1 = vector.load %arg3[%c0_1, %c0_2] : memref<3x128xf32, #tpu.memory_space<vmem>>, vector<3x128xf32>
    %cst = arith.constant dense<0.000000e+00> : vector<16x128xf32>
    %2 = tpu.matmul %0, %1, %cst {dimension_numbers = #tpu.dot_dimension_numbers<[1], [0], [0], [1], [0, 0, 1, 1], [], []>} : vector<16x3xf32>, vector<3x128xf32>, vector<16x128xf32> -> vector<16x128xf32>
    %c0_3 = arith.constant 0 : index
    %c0_4 = arith.constant 0 : index
    %3 = vector.load %arg2[%c0_3, %c0_4] : memref<16x1xf32, #tpu.memory_space<vmem>>, vector<16x1xf32>
    %c0_5 = arith.constant 0 : index
    %c0_6 = arith.constant 0 : index
    %4 = vector.load %arg4[%c0_5, %c0_6] : memref<1x128xf32, #tpu.memory_space<vmem>>, vector<1x128xf32>
    %5 = vector.broadcast %3 : vector<16x1xf32> to vector<16x128xf32>
    %6 = vector.broadcast %4 : vector<1x128xf32> to vector<16x128xf32>
    %7 = arith.mulf %5, %6 : vector<16x128xf32>
    %8 = arith.addf %2, %7 : vector<16x128xf32>
    %c0_7 = arith.constant 0 : index
    %c0_8 = arith.constant 0 : index
    %9 = vector.load %arg5[%c0_7, %c0_8] : memref<1x128xf32, #tpu.memory_space<vmem>>, vector<1x128xf32>
    %10 = vector.broadcast %9 : vector<1x128xf32> to vector<16x128xf32>
    %11 = arith.addf %8, %10 : vector<16x128xf32>
    %cst_9 = arith.constant 0.000000e+00 : f32
    %12 = vector.broadcast %cst_9 : f32 to vector<16x128xf32>
    %13 = arith.maximumf %11, %12 : vector<16x128xf32>
    %c0_10 = arith.constant 0 : index
    %c0_11 = arith.constant 0 : index
    %14 = vector.load %arg8[%c0_10, %c0_11] : memref<128x128xf32, #tpu.memory_space<vmem>>, vector<128x128xf32>
    %cst_12 = arith.constant dense<0.000000e+00> : vector<16x128xf32>
    %15 = tpu.matmul %13, %14, %cst_12 {dimension_numbers = #tpu.dot_dimension_numbers<[1], [0], [0], [1], [0, 0, 1, 1], [], []>} : vector<16x128xf32>, vector<128x128xf32>, vector<16x128xf32> -> vector<16x128xf32>
    %c0_13 = arith.constant 0 : index
    %c0_14 = arith.constant 0 : index
    %16 = vector.load %arg9[%c0_13, %c0_14] : memref<1x128xf32, #tpu.memory_space<vmem>>, vector<1x128xf32>
    %17 = vector.broadcast %16 : vector<1x128xf32> to vector<16x128xf32>
    %18 = arith.addf %15, %17 : vector<16x128xf32>
    %cst_15 = arith.constant 0.000000e+00 : f32
    %19 = vector.broadcast %cst_15 : f32 to vector<16x128xf32>
    %20 = arith.maximumf %18, %19 : vector<16x128xf32>
    %c0_16 = arith.constant 0 : index
    %c0_17 = arith.constant 0 : index
    %21 = vector.load %arg12[%c0_16, %c0_17] : memref<1x128xf32, #tpu.memory_space<vmem>>, vector<1x128xf32>
    %22 = vector.broadcast %21 : vector<1x128xf32> to vector<16x128xf32>
    %23 = arith.mulf %20, %22 : vector<16x128xf32>
    %cst_18 = arith.constant dense<0.000000e+00> : vector<16xf32>
    %24 = vector.multi_reduction <add>, %23, %cst_18 [1] : vector<16x128xf32> to vector<16xf32>
    %25 = vector.shape_cast %24 : vector<16xf32> to vector<16x1xf32>
    %c0_19 = arith.constant 0 : index
    %c0_20 = arith.constant 0 : index
    %26 = memref.load %arg13[%c0_19, %c0_20] : memref<1x1xf32, #tpu.memory_space<smem>>
    %27 = vector.broadcast %26 : f32 to vector<16x1xf32>
    %28 = arith.addf %25, %27 : vector<16x1xf32>
    %c0_21 = arith.constant 0 : index
    %c0_22 = arith.constant 0 : index
    %29 = vector.load %arg14[%c0_21, %c0_22] : memref<16x1xf32, #tpu.memory_space<vmem>>, vector<16x1xf32>
    tpu.vector_store %arg14[%c0_21, %c0_22], %28 {strides = array<i32>} : memref<16x1xf32, #tpu.memory_space<vmem>>, vector<16x1xf32>,
    return
  }
  func.func @transform_0(%arg0: i32) -> (i32, i32) {
    %c0_i32 = arith.constant 0 : i32
    %c0_i32_0 = arith.constant 0 : i32
    return %arg0, %c0_i32 : i32, i32
  }
  func.func @transform_1(%arg0: i32) -> (i32, i32) {
    %c0_i32 = arith.constant 0 : i32
    %c0_i32_0 = arith.constant 0 : i32
    return %arg0, %c0_i32 : i32, i32
  }
  func.func @transform_2(%arg0: i32) -> (i32, i32) {
    %c0_i32 = arith.constant 0 : i32
    %c0_i32_0 = arith.constant 0 : i32
    %c0_i32_1 = arith.constant 0 : i32
    return %c0_i32, %c0_i32_0 : i32, i32
  }
  func.func @transform_3(%arg0: i32) -> (i32, i32) {
    %c0_i32 = arith.constant 0 : i32
    %c0_i32_0 = arith.constant 0 : i32
    %c0_i32_1 = arith.constant 0 : i32
    return %c0_i32, %c0_i32_0 : i32, i32
  }
  func.func @transform_4(%arg0: i32) -> (i32, i32) {
    %c0_i32 = arith.constant 0 : i32
    %c0_i32_0 = arith.constant 0 : i32
    %c0_i32_1 = arith.constant 0 : i32
    return %c0_i32, %c0_i32_0 : i32, i32
  }
  func.func @transform_5(%arg0: i32) -> (i32, i32) {
    %c0_i32 = arith.constant 0 : i32
    %c0_i32_0 = arith.constant 0 : i32
    %c0_i32_1 = arith.constant 0 : i32
    return %c0_i32, %c0_i32_0 : i32, i32
  }
  func.func @transform_6(%arg0: i32) -> (i32, i32) {
    %c0_i32 = arith.constant 0 : i32
    %c0_i32_0 = arith.constant 0 : i32
    %c0_i32_1 = arith.constant 0 : i32
    return %c0_i32, %c0_i32_0 : i32, i32
  }
  func.func @transform_7(%arg0: i32) -> (i32, i32) {
    %c0_i32 = arith.constant 0 : i32
    %c0_i32_0 = arith.constant 0 : i32
    %c0_i32_1 = arith.constant 0 : i32
    return %c0_i32, %c0_i32_0 : i32, i32
  }
  func.func @transform_8(%arg0: i32) -> (i32, i32) {
    %c0_i32 = arith.constant 0 : i32
    %c0_i32_0 = arith.constant 0 : i32
    %c0_i32_1 = arith.constant 0 : i32
    return %c0_i32, %c0_i32_0 : i32, i32
  }
  func.func @transform_9(%arg0: i32) -> (i32, i32) {
    %c0_i32 = arith.constant 0 : i32
    %c0_i32_0 = arith.constant 0 : i32
    %c0_i32_1 = arith.constant 0 : i32
    return %c0_i32, %c0_i32_0 : i32, i32
  }
  func.func @transform_10(%arg0: i32) -> (i32, i32) {
    %c0_i32 = arith.constant 0 : i32
    %c0_i32_0 = arith.constant 0 : i32
    %c0_i32_1 = arith.constant 0 : i32
    return %c0_i32, %c0_i32_0 : i32, i32
  }
  func.func @transform_11(%arg0: i32) -> (i32, i32) {
    %c0_i32 = arith.constant 0 : i32
    %c0_i32_0 = arith.constant 0 : i32
    %c0_i32_1 = arith.constant 0 : i32
    return %c0_i32, %c0_i32_0 : i32, i32
  }
  func.func @transform_12(%arg0: i32) -> (i32, i32) {
    %c0_i32 = arith.constant 0 : i32
    %c0_i32_0 = arith.constant 0 : i32
    %c0_i32_1 = arith.constant 0 : i32
    return %c0_i32, %c0_i32_0 : i32, i32
  }
  func.func @transform_13(%arg0: i32) -> (i32, i32) {
    %c0_i32 = arith.constant 0 : i32
    %c0_i32_0 = arith.constant 0 : i32
    return %arg0, %c0_i32 : i32, i32
  }
}

</mosaic_0001>

<llo_original>
// kernel: tpu_custom_call.1
$region0: #{tpu_custom_call.1}
  #allocation0 [shape = 'u32[]', space=smem, size = 0x4, offset = 0x4, fixed_abs, tag = 'smem constant byte address 0x4 - core index']
  #allocation1 [shape = 'u32[144,128]{1,0:T(1,128)}', space=vmem, size = 0x12000, scoped, tag = 'internal scratch']
  #allocation2 [shape = 'f32[1,1]{1,0:T(1,128)S(6)}', space=smem, size = 0x200, scoped, tag = 'scoped memory for tpu_custom_call.1']
  %s0 = inlined_call_operand.vmem [shape: f32[16,3], index: 0, kind: input, shape index: {}]
  %s1 = inlined_call_operand.vmem [shape: f32[16,1], index: 1, kind: input, shape index: {}]
  %s2 = inlined_call_operand.vmem [shape: f32[3,128], index: 2, kind: input, shape index: {}]
  %s3 = inlined_call_operand.vmem [shape: f32[1,128], index: 3, kind: input, shape index: {}]
  %s4 = inlined_call_operand.vmem [shape: f32[1,128], index: 4, kind: input, shape index: {}]
  %s5 = inlined_call_operand.vmem [shape: f32[1,128], index: 5, kind: input, shape index: {}]
  %s6 = inlined_call_operand.vmem [shape: f32[1,128], index: 6, kind: input, shape index: {}]
  %s7 = inlined_call_operand.hbm [shape: f32[128,128], index: 7, kind: input, shape index: {}]
  %s8 = inlined_call_operand.vmem [shape: f32[1,128], index: 8, kind: input, shape index: {}]
  %s9 = inlined_call_operand.vmem [shape: f32[1,128], index: 9, kind: input, shape index: {}]
  %s10 = inlined_call_operand.vmem [shape: f32[1,128], index: 10, kind: input, shape index: {}]
  %s11 = inlined_call_operand.vmem [shape: f32[1,128], index: 11, kind: input, shape index: {}]
  %s12 = inlined_call_operand.<no memory space> [shape: f32[1,1], index: 12, kind: input, shape index: {}]
  %s13 = inlined_call_operand.vmem [shape: f32[16,1], index: 13, kind: output, shape index: {}]
  %s14 = sld [smem:[#allocation0]]
  $region66: #{tpu_custom_call.1} parent=0
    _
  %s16 = ssub.s32 1, %s14
  %s17 = scalar_select 0, %s16, %s14
  %18 = sst [smem:[#allocation2]] %s12
  $region1: #{tpu_custom_call.1} parent=0
    #allocation3 [shape = 'u8[65536]{0}', space=vmem, size = 0x10000, scoped, tag = 'input window, operand 7, single buffered']
    #allocation4 [shape = 's32[1]{0}', space=sflag, size = 0x4, scoped, tag = 'scoped memory for tpu_custom_call.1']
    %19 = vsyncpa [#allocation4], 0
    // Predicated region
    $region2: #{tpu_custom_call.1} parent=1 // pred_check
      _
    $region3: #{tpu_custom_call.1} parent=1 // pred_check_branch
      %21 = sbr.rel (0) target = $region5
    $region4: #{tpu_custom_call.1} parent=1 // pred_region
      _
    $region5: #{tpu_custom_call.1} parent=1 // pred_fallthru
      _
    // Predicated region
    $region6: #{tpu_custom_call.1} parent=1 // pred_check
      _
    $region7: #{tpu_custom_call.1} parent=1 // pred_check_branch
      %23 = sbr.rel (0) target = $region9
    $region8: #{tpu_custom_call.1} parent=1 // pred_region
      _
    $region9: #{tpu_custom_call.1} parent=1 // pred_fallthru
      _
    // Predicated region
    $region10: #{tpu_custom_call.1} parent=1 // pred_check
      _
    $region11: #{tpu_custom_call.1} parent=1 // pred_check_branch
      %25 = sbr.rel (0) target = $region13
    $region12: #{tpu_custom_call.1} parent=1 // pred_region
      _
    $region13: #{tpu_custom_call.1} parent=1 // pred_fallthru
      _
    // Predicated region
    $region14: #{tpu_custom_call.1} parent=1 // pred_check
      _
    $region15: #{tpu_custom_call.1} parent=1 // pred_check_branch
      %27 = sbr.rel (0) target = $region17
    $region16: #{tpu_custom_call.1} parent=1 // pred_region
      _
    $region17: #{tpu_custom_call.1} parent=1 // pred_fallthru
      _
    // Predicated region
    $region18: #{tpu_custom_call.1} parent=1 // pred_check
      _
    $region19: #{tpu_custom_call.1} parent=1 // pred_check_branch
      %29 = sbr.rel (0) target = $region21
    $region20: #{tpu_custom_call.1} parent=1 // pred_region
      _
    $region21: #{tpu_custom_call.1} parent=1 // pred_fallthru
      _
    // Predicated region
    $region22: #{tpu_custom_call.1} parent=1 // pred_check
      _
    $region23: #{tpu_custom_call.1} parent=1 // pred_check_branch
      %31 = sbr.rel (0) target = $region25
    $region24: #{tpu_custom_call.1} parent=1 // pred_region
      _
    $region25: #{tpu_custom_call.1} parent=1 // pred_fallthru
      _
    // Predicated region
    $region26: #{tpu_custom_call.1} parent=1 // pred_check
      _
    $region27: #{tpu_custom_call.1} parent=1 // pred_check_branch
      %33 = sbr.rel (0) target = $region29
    $region28: #{tpu_custom_call.1} parent=1 // pred_region
      _
    $region29: #{tpu_custom_call.1} parent=1 // pred_fallthru
      _
    // Predicated region
    $region30: #{tpu_custom_call.1} parent=1 // pred_check
      _
    $region31: #{tpu_custom_call.1} parent=1 // pred_check_branch
      %35 = sbr.rel (0) target = $region33
    $region32: #{tpu_custom_call.1} parent=1 // pred_region
      %s37 = ssub.s32 2048, 2048
      %38 = vsyncadd [#allocation4], %s37
      %s39 = sshll.u32 [#allocation3], 4
      %s40 = int_to_ptr.vmem [resolvable:$true] %s39
      %45 = dma.hbm_to_vmem [thread:$0]  %s7, 2048, %s40, [#allocation4], 128, 128, 8
    $region33: #{tpu_custom_call.1} parent=1 // pred_fallthru
      _
    // Predicated region
    $region34: #{tpu_custom_call.1} parent=1 // pred_check
      _
    $region35: #{tpu_custom_call.1} parent=1 // pred_check_branch
      %47 = sbr.rel (0) target = $region37
    $region36: #{tpu_custom_call.1} parent=1 // pred_region
      _
    $region37: #{tpu_custom_call.1} parent=1 // pred_fallthru
      _
    // Predicated region
    $region38: #{tpu_custom_call.1} parent=1 // pred_check
      _
    $region39: #{tpu_custom_call.1} parent=1 // pred_check_branch
      %49 = sbr.rel (0) target = $region41
    $region40: #{tpu_custom_call.1} parent=1 // pred_region
      _
    $region41: #{tpu_custom_call.1} parent=1 // pred_fallthru
      _
    // Predicated region
    $region42: #{tpu_custom_call.1} parent=1 // pred_check
      _
    $region43: #{tpu_custom_call.1} parent=1 // pred_check_branch
      %51 = sbr.rel (0) target = $region45
    $region44: #{tpu_custom_call.1} parent=1 // pred_region
      _
    $region45: #{tpu_custom_call.1} parent=1 // pred_fallthru
      _
    // Predicated region
    $region46: #{tpu_custom_call.1} parent=1 // pred_check
      _
    $region47: #{tpu_custom_call.1} parent=1 // pred_check_branch
      %53 = sbr.rel (0) target = $region49
    $region48: #{tpu_custom_call.1} parent=1 // pred_region
      _
    $region49: #{tpu_custom_call.1} parent=1 // pred_fallthru
      _
    // Predicated region
    $region50: #{tpu_custom_call.1} parent=1 // pred_check
      _
    $region51: #{tpu_custom_call.1} parent=1 // pred_check_branch
      %55 = sbr.rel (0) target = $region53
    $region52: #{tpu_custom_call.1} parent=1 // pred_region
      _
    $region53: #{tpu_custom_call.1} parent=1 // pred_fallthru
      _
    // Predicated region
    $region54: #{tpu_custom_call.1} parent=1 // pred_check
      _
    $region55: #{tpu_custom_call.1} parent=1 // pred_check_branch
      %57 = sbr.rel (0) target = $region57
    $region56: #{tpu_custom_call.1} parent=1 // pred_region
      %58 = dma.done [#allocation4], 2048
    $region57: #{tpu_custom_call.1} parent=1 // pred_fallthru
      _
    %v59 = vld [vmem:[%s0] sm:$0xff]
    %v60 = vld [vmem:[%s0 + $0x8] sm:$0xff]
    %v61 = vld [vmem:[%s2] sm:$0x7]
    %v62 = vld [vmem:[%s1] sm:$0xff]
    %v63 = vld [vmem:[%s1 + $0x8] sm:$0xff]
    %v64 = vld [vmem:[%s3] sm:$0x1]
    %66 = vset.pattern.permute.xlu0 0
    %67 = vperm.xlu0 %66, %v62
    %v68 = vpop.permute.xlu0 %67
    %71 = vset.pattern.permute.xlu0 0
    %72 = vperm.xlu0 %71, %v63
    %v73 = vpop.permute.xlu0 %72
    %v76 = vlaneseq
    %v77 = vshrl.u32 %v76, 7
    %v78 = vsub.s32 0, %v77
    %v79 = vrot.slane %v64, %v78
    %v81 = vmul.f32 %v68, %v79
    %v82 = vmul.f32 %v73, %v79
    %vm83 = vcmask 23552
    %v85 = vsel %vm83, %v59, 0
    %v88 = vsel %vm83, %v60, 0
    %vm90 = vcmask 1042432
    %v92 = vsel %vm90, %v61, 0
    %94 = vmatprep.subr.mxu0 0.0
    %95 = vmatpush1.msra.mxu0 0.0
    %96 = vmatprep.subr.mxu0 0.0
    %97 = vmatpush1.msra.mxu0 0.0
    %98 = vmatprep.subr.mxu0 0.0
    %99 = vmatpush1.msra.mxu0 0.0
    %100 = vmatprep.subr.mxu0 0.0
    %101 = vmatpush1.msra.mxu0 0.0
    %102 = vmatprep.subr.mxu0 0.0
    %103 = vmatpush1.msra.mxu0 0.0
    %104 = vmatprep.subr.mxu0 0.0
    %105 = vmatpush1.msra.mxu0 0.0
    %106 = vmatprep.subr.mxu0 0.0
    %107 = vmatpush1.msra.mxu0 0.0
    %108 = vmatprep.subr.mxu0 0.0
    %109 = vmatpush1.msra.mxu0 0.0
    %110 = vmatprep.subr.mxu0 0.0
    %111 = vmatpush1.msra.mxu0 0.0
    %112 = vmatprep.subr.mxu0 0.0
    %113 = vmatpush1.msra.mxu0 0.0
    %114 = vmatprep.subr.mxu0 0.0
    %115 = vmatpush1.msra.mxu0 0.0
    %116 = vmatprep.subr.mxu0 0.0
    %117 = vmatpush1.msra.mxu0 0.0
    %118 = vmatprep.subr.mxu0 0.0
    %119 = vmatpush1.msra.mxu0 0.0
    %120 = vmatprep.subr.mxu0 0.0
    %121 = vmatpush1.msra.mxu0 0.0
    %122 = vmatprep.subr.mxu0 0.0
    %123 = vmatpush1.msra.mxu0 0.0
    %124 = vmatprep.subr.mxu0 0.0
    %125 = vmatpush1.msra.mxu0 %v92
    %126 = vmatprep.subr.mxu0 0.0
    %127 = vmatpush2.msra.mxu0 0.0
    %128 = vmatprep.subr.mxu0 0.0
    %129 = vmatpush2.msra.mxu0 0.0
    %130 = vmatprep.subr.mxu0 0.0
    %131 = vmatpush2.msra.mxu0 0.0
    %132 = vmatprep.subr.mxu0 0.0
    %133 = vmatpush2.msra.mxu0 0.0
    %134 = vmatprep.subr.mxu0 0.0
    %135 = vmatpush2.msra.mxu0 0.0
    %136 = vmatprep.subr.mxu0 0.0
    %137 = vmatpush2.msra.mxu0 0.0
    %138 = vmatprep.subr.mxu0 0.0
    %139 = vmatpush2.msra.mxu0 0.0
    %140 = vmatprep.subr.mxu0 0.0
    %141 = vmatpush2.msra.mxu0 0.0
    %142 = vmatprep.subr.mxu0 0.0
    %143 = vmatpush2.msra.mxu0 0.0
    %144 = vmatprep.subr.mxu0 0.0
    %145 = vmatpush2.msra.mxu0 0.0
    %146 = vmatprep.subr.mxu0 0.0
    %147 = vmatpush2.msra.mxu0 0.0
    %148 = vmatprep.subr.mxu0 0.0
    %149 = vmatpush2.msra.mxu0 0.0
    %150 = vmatprep.subr.mxu0 0.0
    %151 = vmatpush2.msra.mxu0 0.0
    %152 = vmatprep.subr.mxu0 0.0
    %153 = vmatpush2.msra.mxu0 0.0
    %154 = vmatprep.subr.mxu0 0.0
    %155 = vmatpush2.msra.mxu0 0.0
    %156 = vmatprep.subr.mxu0 0.0
    %157 = vmatpush2.msra.mxu0 0.0
    %158 = vmatprep.mubr.f32.mxu0 0.0
    %159 = vmatmul.mubr.f32.gmra.mxu0 %v85
    %v160 = vpop.f32.mrf.mxu0
    %v161 = vadd.f32 %v81, %v160
    %v162 = vpop.f32.mrf.mxu0
    %163 = vmatprep.mubr.f32.mxu0 0.0
    %164 = vmatmul.mubr.f32.gmra.mxu0 %v88
    %v165 = vpop.f32.mrf.mxu0
    %v166 = vadd.f32 %v82, %v165
    %v167 = vpop.f32.mrf.mxu0
    %168 = vdwg.mxu0
    %v169 = vld [vmem:[%s4] sm:$0x1]
    %v171 = vlaneseq
    %v172 = vshrl.u32 %v171, 7
    %v173 = vsub.s32 0, %v172
    %v174 = vrot.slane %v169, %v173
    %v176 = vadd.f32 %v161, %v174
    %v177 = vadd.f32 %v166, %v174
    %v178 = vmax.f32 %v176, 0.0
    %v179 = vmax.f32 %v177, 0.0
    %v180 = vld [vmem:[#allocation3] sm:$0xff]
    %v181 = vld [vmem:[#allocation3 + $0x8] sm:$0xff]
    %v182 = vld [vmem:[#allocation3 + $0x10] sm:$0xff]
    %v183 = vld [vmem:[#allocation3 + $0x18] sm:$0xff]
    %v184 = vld [vmem:[#allocation3 + $0x20] sm:$0xff]
    %v185 = vld [vmem:[#allocation3 + $0x28] sm:$0xff]
    %v186 = vld [vmem:[#allocation3 + $0x30] sm:$0xff]
    %v187 = vld [vmem:[#allocation3 + $0x38] sm:$0xff]
    %v188 = vld [vmem:[#allocation3 + $0x40] sm:$0xff]
    %v189 = vld [vmem:[#allocation3 + $0x48] sm:$0xff]
    %v190 = vld [vmem:[#allocation3 + $0x50] sm:$0xff]
    %v191 = vld [vmem:[#allocation3 + $0x58] sm:$0xff]
    %v192 = vld [vmem:[#allocation3 + $0x60] sm:$0xff]
    %v193 = vld [vmem:[#allocation3 + $0x68] sm:$0xff]
    %v194 = vld [vmem:[#allocation3 + $0x70] sm:$0xff]
    %v195 = vld [vmem:[#allocation3 + $0x78] sm:$0xff]
    %v196 = vld [vmem:[%s8] sm:$0x1]
    %v198 = vlaneseq
    %v199 = vshrl.u32 %v198, 7
    %v200 = vsub.s32 0, %v199
    %v201 = vrot.slane %v196, %v200
    %203 = vmatprep.subr.mxu0 0.0
    %204 = vmatpush1.msra.mxu0 %v195
    %205 = vmatprep.subr.mxu0 0.0
    %206 = vmatpush1.msra.mxu0 %v194
    %207 = vmatprep.subr.mxu0 0.0
    %208 = vmatpush1.msra.mxu0 %v193
    %209 = vmatprep.subr.mxu0 0.0
    %210 = vmatpush1.msra.mxu0 %v192
    %211 = vmatprep.subr.mxu0 0.0
    %212 = vmatpush1.msra.mxu0 %v191
    %213 = vmatprep.subr.mxu0 0.0
    %214 = vmatpush1.msra.mxu0 %v190
    %215 = vmatprep.subr.mxu0 0.0
    %216 = vmatpush1.msra.mxu0 %v189
    %217 = vmatprep.subr.mxu0 0.0
    %218 = vmatpush1.msra.mxu0 %v188
    %219 = vmatprep.subr.mxu0 0.0
    %220 = vmatpush1.msra.mxu0 %v187
    %221 = vmatprep.subr.mxu0 0.0
    %222 = vmatpush1.msra.mxu0 %v186
    %223 = vmatprep.subr.mxu0 0.0
    %224 = vmatpush1.msra.mxu0 %v185
    %225 = vmatprep.subr.mxu0 0.0
    %226 = vmatpush1.msra.mxu0 %v184
    %227 = vmatprep.subr.mxu0 0.0
    %228 = vmatpush1.msra.mxu0 %v183
    %229 = vmatprep.subr.mxu0 0.0
    %230 = vmatpush1.msra.mxu0 %v182
    %231 = vmatprep.subr.mxu0 0.0
    %232 = vmatpush1.msra.mxu0 %v181
    %233 = vmatprep.subr.mxu0 0.0
    %234 = vmatpush1.msra.mxu0 %v180
    %235 = vmatprep.subr.mxu0 0.0
    %236 = vmatpush2.msra.mxu0 0.0
    %237 = vmatprep.subr.mxu0 0.0
    %238 = vmatpush2.msra.mxu0 0.0
    %239 = vmatprep.subr.mxu0 0.0
    %240 = vmatpush2.msra.mxu0 0.0
    %241 = vmatprep.subr.mxu0 0.0
    %242 = vmatpush2.msra.mxu0 0.0
    %243 = vmatprep.subr.mxu0 0.0
    %244 = vmatpush2.msra.mxu0 0.0
    %245 = vmatprep.subr.mxu0 0.0
    %246 = vmatpush2.msra.mxu0 0.0
    %247 = vmatprep.subr.mxu0 0.0
    %248 = vmatpush2.msra.mxu0 0.0
    %249 = vmatprep.subr.mxu0 0.0
    %250 = vmatpush2.msra.mxu0 0.0
    %251 = vmatprep.subr.mxu0 0.0
    %252 = vmatpush2.msra.mxu0 0.0
    %253 = vmatprep.subr.mxu0 0.0
    %254 = vmatpush2.msra.mxu0 0.0
    %255 = vmatprep.subr.mxu0 0.0
    %256 = vmatpush2.msra.mxu0 0.0
    %257 = vmatprep.subr.mxu0 0.0
    %258 = vmatpush2.msra.mxu0 0.0
    %259 = vmatprep.subr.mxu0 0.0
    %260 = vmatpush2.msra.mxu0 0.0
    %261 = vmatprep.subr.mxu0 0.0
    %262 = vmatpush2.msra.mxu0 0.0
    %263 = vmatprep.subr.mxu0 0.0
    %264 = vmatpush2.msra.mxu0 0.0
    %265 = vmatprep.subr.mxu0 0.0
    %266 = vmatpush2.msra.mxu0 0.0
    %267 = vmatprep.mubr.f32.mxu0 0.0
    %268 = vmatmul.mubr.f32.gmra.mxu0 %v178
    %v269 = vpop.f32.mrf.mxu0
    %v270 = vadd.f32 %v201, %v269
    %v271 = vpop.f32.mrf.mxu0
    %272 = vmatprep.mubr.f32.mxu0 0.0
    %273 = vmatmul.mubr.f32.gmra.mxu0 %v179
    %v274 = vpop.f32.mrf.mxu0
    %v275 = vadd.f32 %v201, %v274
    %v276 = vpop.f32.mrf.mxu0
    %277 = vdwg.mxu0
    %v278 = vmax.f32 %v270, 0.0
    %v279 = vmax.f32 %v275, 0.0
    %v280 = vld [vmem:[%s11] sm:$0x1]
    %v282 = vlaneseq
    %v283 = vshrl.u32 %v282, 7
    %v284 = vsub.s32 0, %v283
    %v285 = vrot.slane %v280, %v284
    %v287 = vmul.f32 %v278, %v285
    %v288 = vmul.f32 %v279, %v285
    %289 = vadd.xlane.f32.xlu0 %v287
    %v290 = vpop.xlane.xlu0 %289
    %291 = vadd.xlane.f32.xlu0 %v288
    %v292 = vpop.xlane.xlu0 %291
    %s293 = sld [smem:[#allocation2]]
    %v294 = vstv %s293
    %v295 = vadd.f32 %v290, %v294
    %v296 = vadd.f32 %v292, %v294
    %vm297 = vcmask 7168
    %298 = vst.msk [vmem:[%s13] sm:$0xff] %vm297, %v295
    %299 = vst.msk [vmem:[%s13 + $0x8] sm:$0xff] %vm297, %v296
    // Predicated region
    $region58: #{tpu_custom_call.1} parent=1 // pred_check
      _
    $region59: #{tpu_custom_call.1} parent=1 // pred_check_branch
      %301 = sbr.rel (0) target = $region61
    $region60: #{tpu_custom_call.1} parent=1 // pred_region
      _
    $region61: #{tpu_custom_call.1} parent=1 // pred_fallthru
      _
    // Predicated region
    $region62: #{tpu_custom_call.1} parent=1 // pred_check
      _
    $region63: #{tpu_custom_call.1} parent=1 // pred_check_branch
      %303 = sbr.rel (0) target = $region65
    $region64: #{tpu_custom_call.1} parent=1 // pred_region
      _
    $region65: #{tpu_custom_call.1} parent=1 // pred_fallthru
      _
    %304 = vsyncpa [#allocation4], 1

</llo_original>
